<compile_context>
chip_gen: v6e
topology: v6e:2x2x1
jax: 0.10.0
libtpu: 0.0.40
codegen_flags: <defaults>
</compile_context>

<pallas_src>
import functools

import jax
import jax.numpy as jnp
from jax.experimental import pallas as pl
from jax.experimental.pallas import tpu as pltpu

LANES = 128
SUBLANES = 8
FOLD_K = 8                      # independent in-tile accumulators (ILP)
ALIGN = SUBLANES * FOLD_K       # 64: covers f32/bf16/int8 packing + K-fold
VMEM_INPUT_BUDGET = 32 * 1024 * 1024   # double-buffered input bytes
VMEM_LIMIT_BYTES = 48 * 1024 * 1024    # scoped-VMEM limit (safe on v5e/v6e/v7x)


def _round_up(n, m):
    return (n + m - 1) // m * m


def _charbonnier_kernel(*refs, eps, rows, block_rows, fold_k, has_mask,
                        needs_row_mask):
    """Per row-tile: out[t] = (8,128) partial sum of sqrt((x-y)^2+eps)[*mask]."""
    if has_mask:
        x_ref, y_ref, m_ref, out_ref = refs
    else:
        x_ref, y_ref, out_ref = refs
        m_ref = None

    d = x_ref[...].astype(jnp.float32) - y_ref[...].astype(jnp.float32)
    loss = jnp.sqrt(d * d + eps)
    if has_mask:
        loss = loss * m_ref[...].astype(jnp.float32)

    if needs_row_mask:
        # Only whole rows past the end of the (rows, 128) slab are invalid
        # (the boundary block's over-read of unspecified VMEM); wrapper-side
        # zero padding inside the slab is corrected analytically outside.
        # Select (not multiply) so NaN/Inf in the over-read region cannot
        # poison the sum.  (Row index fits int32 for any tensor < 2^38 elems.)
        t = pl.program_id(0)
        row_ids = jax.lax.broadcasted_iota(jnp.int32, (block_rows, LANES), 0)
        loss = jnp.where(t * block_rows + row_ids < rows, loss, 0.0)

    # K independent (8,128) accumulators expose ILP across the 4 VALU slots
    # (dependent-add chain block_rows/(8K) instead of block_rows/8), then a
    # short K-fold collapses them to the tile's single (8,128) partial.
    chunks = block_rows // (SUBLANES * fold_k)
    partial = loss.reshape(chunks, fold_k, SUBLANES, LANES).sum(axis=0)
    out_ref[0] = partial.sum(axis=0)


def charbonnier_loss(x, y, mask=None, *, eps=1e-6, mode=None, block_rows=None):
    """Pallas implementation of CharbonnierLoss.forward.

    x, y: arrays of identical shape (channel dim = axis 1), any float dtype.
    mask: optional array broadcastable to x.shape (kept in its native dtype).
    mode: None -> mean over all elements; 'sum' -> sum / C (channel dim).
    Returns a scalar float32.
    """
    assert x.shape == y.shape
    n_channels = x.shape[1]
    numel = x.size

    streams = [x, y]
    has_mask = mask is not None
    if has_mask:
        if mask.shape != x.shape:
            # TODO(synk): structurally-broadcast masks (per-channel/per-batch)
            # could be fed via a BlockSpec index_map over the original shape
            # instead of materializing a full-size copy here.
            mask = jnp.broadcast_to(mask, x.shape)
        streams.append(mask)

    # Lane-dense (rows, 128) slab.  Pure metadata reshape (no copy) in the
    # common case numel % 128 == 0 with >= 8 rows; otherwise a single small
    # zero-pad (ragged/tiny shapes only — a (rows,128) view can't exist
    # without a copy there).  Padded elements contribute exactly sqrt(eps)
    # (no-mask) or 0 (masked), corrected analytically below.
    padded_len = _round_up(numel, LANES)
    if padded_len // LANES < SUBLANES:
        padded_len = LANES * SUBLANES
    rows = padded_len // LANES

    flat = []
    for a in streams:
        a = a.reshape(-1)
        if padded_len != numel:
            a = jnp.pad(a, (0, padded_len - numel))
        flat.append(a.reshape(rows, LANES))

    itemsizes = [jnp.dtype(a.dtype).itemsize for a in flat]
    bytes_per_row = LANES * sum(itemsizes)

    # Block sizing: ~4 MiB per (widest) stream per buffer, capped so the
    # double-buffered inputs stay within VMEM_INPUT_BUDGET (v7x-safe), and
    # aligned to 64 rows (covers bf16/int8 sublane packing and the K-fold).
    if block_rows is None:
        block_rows = (4 * 1024 * 1024) // (LANES * max(itemsizes))
    block_rows = min(int(block_rows), VMEM_INPUT_BUDGET // (2 * bytes_per_row))
    block_rows = max(block_rows, SUBLANES)
    if rows >= ALIGN:
        block_rows = max(ALIGN, (block_rows // ALIGN) * ALIGN)
        block_rows = min(block_rows, (rows // ALIGN) * ALIGN)
    else:
        block_rows = (rows // SUBLANES) * SUBLANES  # rows >= 8 guaranteed

    fold_k = FOLD_K
    while block_rows % (SUBLANES * fold_k) != 0:
        fold_k //= 2

    total_tiles = pl.cdiv(rows, block_rows)
    needs_row_mask = (rows % block_rows) != 0   # boundary block over-reads

    kernel = functools.partial(
        _charbonnier_kernel,
        eps=float(eps),
        rows=rows,
        block_rows=block_rows,
        fold_k=fold_k,
        has_mask=has_mask,
        needs_row_mask=needs_row_mask,
    )

    in_specs = [pl.BlockSpec((block_rows, LANES), lambda t: (t, 0))
                for _ in flat]

    partials = pl.pallas_call(
        kernel,
        out_shape=jax.ShapeDtypeStruct((total_tiles, SUBLANES, LANES),
                                       jnp.float32),
        grid_spec=pltpu.PrefetchScalarGridSpec(
            num_scalar_prefetch=0,
            grid=(total_tiles,),
            in_specs=in_specs,
            out_specs=pl.BlockSpec((1, SUBLANES, LANES), lambda t: (t, 0, 0)),
        ),
        compiler_params=pltpu.CompilerParams(
            dimension_semantics=("parallel",),
            vmem_limit_bytes=VMEM_LIMIT_BYTES,
        ),
    )(*flat)

    # Single tiny cross-lane reduction + analytic padding correction +
    # normalization, all outside the hot loop.
    total = jnp.sum(partials)
    if padded_len != numel and not has_mask:
        total = total - (padded_len - numel) * jnp.sqrt(
            jnp.asarray(eps, jnp.float32))
    denom = float(n_channels) if mode == "sum" else float(numel)
    return total / denom


if __name__ == "__main__":
    key = jax.random.PRNGKey(0)
    kx, ky, km = jax.random.split(key, 3)

    B, C, H, W = 2, 4, 16, 16
    x = jax.random.normal(kx, (B, C, H, W), dtype=jnp.float32)
    y = jax.random.normal(ky, (B, C, H, W), dtype=jnp.float32)
    mask = (jax.random.uniform(km, (B, C, H, W)) > 0.5).astype(jnp.float32)
    eps = 1e-6

    # 1) default mode (mean), no mask, f32
    out_mean = jax.block_until_ready(charbonnier_loss(x, y, eps=eps, mode=None))
    ref_mean = jnp.mean(jnp.sqrt((x - y) ** 2 + eps))
    assert jnp.allclose(out_mean, ref_mean, rtol=1e-5, atol=1e-6), (out_mean, ref_mean)

    # 2) mode='sum' with mask
    out_sum = jax.block_until_ready(
        charbonnier_loss(x, y, mask=mask, eps=eps, mode="sum"))
    ref_sum = jnp.sum(jnp.sqrt((x - y) ** 2 + eps) * mask) / C
    assert jnp.allclose(out_sum, ref_sum, rtol=1e-5, atol=1e-5), (out_sum, ref_sum)

    # 3) bf16 inputs stay bf16 through the DMA (upcast inside the kernel)
    xb = x.astype(jnp.bfloat16)
    yb = y.astype(jnp.bfloat16)
    out_bf16 = jax.block_until_ready(charbonnier_loss(xb, yb, eps=eps))
    ref_bf16 = jnp.mean(
        jnp.sqrt((xb.astype(jnp.float32) - yb.astype(jnp.float32)) ** 2 + eps))
    assert jnp.allclose(out_bf16, ref_bf16, rtol=1e-4, atol=1e-5), (out_bf16, ref_bf16)

    # 4) ragged shape (numel % 128 != 0) -> pad path + analytic correction
    xo = jax.random.normal(kx, (2, 3, 7, 5), dtype=jnp.float32)
    yo = jax.random.normal(ky, (2, 3, 7, 5), dtype=jnp.float32)
    out_odd = jax.block_until_ready(charbonnier_loss(xo, yo, eps=eps))
    ref_odd = jnp.mean(jnp.sqrt((xo - yo) ** 2 + eps))
    assert jnp.allclose(out_odd, ref_odd, rtol=1e-5, atol=1e-6), (out_odd, ref_odd)

    # 5) 128-aligned shape whose row count is not a multiple of the block:
    #    exercises the multi-tile path and the boundary-block row mask.
    xm = jax.random.normal(kx, (2, 4, 32, 36), dtype=jnp.float32)  # 9216 = 72*128
    ym = jax.random.normal(ky, (2, 4, 32, 36), dtype=jnp.float32)
    out_multi = jax.block_until_ready(charbonnier_loss(xm, ym, eps=eps))
    ref_multi = jnp.mean(jnp.sqrt((xm - ym) ** 2 + eps))
    assert jnp.allclose(out_multi, ref_multi, rtol=1e-5, atol=1e-6), (out_multi, ref_multi)

    print("KERNEL_OK")
</pallas_src>

<mosaic_0001>
module attributes {stable_mosaic.version = 11 : i64} {
  func.func @_charbonnier_kernel(%arg0: i32, %arg1: memref<16x128xf32, #tpu.memory_space<vmem>>, %arg2: memref<16x128xf32, #tpu.memory_space<vmem>>, %arg3: memref<1x8x128xf32, #tpu.memory_space<vmem>>) attributes {dimension_semantics = [#tpu.dimension_semantics<parallel>], iteration_bounds = array<i64: 1>, scalar_prefetch = 0 : i64, scratch_operands = 0 : i64, tpu.core_type = #tpu.core_type<tc>, window_params = [{transform_indices = @transform_0, window_bounds = array<i64: 16, 128>}, {transform_indices = @transform_1, window_bounds = array<i64: 16, 128>}, {transform_indices = @transform_2, window_bounds = array<i64: 1, 8, 128>}]} {
    %c0 = arith.constant 0 : index
    %c0_0 = arith.constant 0 : index
    %0 = vector.load %arg1[%c0, %c0_0] : memref<16x128xf32, #tpu.memory_space<vmem>>, vector<16x128xf32>
    %c0_1 = arith.constant 0 : index
    %c0_2 = arith.constant 0 : index
    %1 = vector.load %arg2[%c0_1, %c0_2] : memref<16x128xf32, #tpu.memory_space<vmem>>, vector<16x128xf32>
    %2 = arith.subf %0, %1 : vector<16x128xf32>
    %3 = arith.mulf %2, %2 : vector<16x128xf32>
    %cst = arith.constant 9.99999997E-7 : f32
    %4 = vector.broadcast %cst : f32 to vector<16x128xf32>
    %5 = arith.addf %3, %4 : vector<16x128xf32>
    %6 = math.sqrt %5 : vector<16x128xf32>
    %7 = vector.shape_cast %6 : vector<16x128xf32> to vector<1x2x8x128xf32>
    %cst_3 = arith.constant dense<0.000000e+00> : vector<2x8x128xf32>
    %8 = vector.multi_reduction <add>, %7, %cst_3 [0] : vector<1x2x8x128xf32> to vector<2x8x128xf32>
    %cst_4 = arith.constant dense<0.000000e+00> : vector<8x128xf32>
    %9 = vector.multi_reduction <add>, %8, %cst_4 [0] : vector<2x8x128xf32> to vector<8x128xf32>
    %c0_5 = arith.constant 0 : index
    %c0_6 = arith.constant 0 : index
    %c0_7 = arith.constant 0 : index
    %10 = vector.load %arg3[%c0_5, %c0_6, %c0_7] : memref<1x8x128xf32, #tpu.memory_space<vmem>>, vector<1x8x128xf32>
    %11 = vector.shape_cast %10 : vector<1x8x128xf32> to vector<8x128xf32>
    %12 = vector.shape_cast %9 : vector<8x128xf32> to vector<1x8x128xf32>
    tpu.vector_store %arg3[%c0_5, %c0_6, %c0_7], %12 {strides = array<i32>} : memref<1x8x128xf32, #tpu.memory_space<vmem>>, vector<1x8x128xf32>,
    return
  }
  func.func @transform_0(%arg0: i32) -> (i32, i32) {
    %c0_i32 = arith.constant 0 : i32
    %c0_i32_0 = arith.constant 0 : i32
    return %arg0, %c0_i32 : i32, i32
  }
  func.func @transform_1(%arg0: i32) -> (i32, i32) {
    %c0_i32 = arith.constant 0 : i32
    %c0_i32_0 = arith.constant 0 : i32
    return %arg0, %c0_i32 : i32, i32
  }
  func.func @transform_2(%arg0: i32) -> (i32, i32, i32) {
    %c0_i32 = arith.constant 0 : i32
    %c0_i32_0 = arith.constant 0 : i32
    %c0_i32_1 = arith.constant 0 : i32
    return %arg0, %c0_i32, %c0_i32_0 : i32, i32, i32
  }
}

</mosaic_0001>

<llo_original>
// kernel: tpu_custom_call.1
$region0: #{tpu_custom_call.1}
  #allocation0 [shape = 'u32[]', space=smem, size = 0x4, offset = 0x4, fixed_abs, tag = 'smem constant byte address 0x4 - core index']
  #allocation1 [shape = 'u32[144,128]{1,0:T(1,128)}', space=vmem, size = 0x12000, scoped, tag = 'internal scratch']
  %s0 = inlined_call_operand.hbm [shape: f32[16,128], index: 0, kind: input, shape index: {}]
  %s1 = inlined_call_operand.hbm [shape: f32[16,128], index: 1, kind: input, shape index: {}]
  %s2 = inlined_call_operand.hbm [shape: f32[1,8,128], index: 2, kind: output, shape index: {}]
  %s3 = sld [smem:[#allocation0]]
  $region26: #{tpu_custom_call.1} parent=0
    _
  %s5 = ssub.s32 1, %s3
  %s6 = scalar_select 0, %s5, %s3
  $region1: #{tpu_custom_call.1} parent=0
    #allocation2 [shape = 'u8[8192]{0}', space=vmem, size = 0x2000, scoped, tag = 'input window, operand 0, single buffered']
    #allocation3 [shape = 's32[1]{0}', space=sflag, size = 0x4, scoped, tag = 'scoped memory for tpu_custom_call.1']
    #allocation4 [shape = 's32[1]{0}', space=sflag, size = 0x4, scoped, tag = 'scoped memory for tpu_custom_call.1']
    #allocation5 [shape = 'u8[8192]{0}', space=vmem, size = 0x2000, scoped, tag = 'input window, operand 1, single buffered']
    #allocation6 [shape = 's32[1]{0}', space=sflag, size = 0x4, scoped, tag = 'scoped memory for tpu_custom_call.1']
    #allocation7 [shape = 'u8[4096]{0}', space=vmem, size = 0x1000, scoped, tag = 'output window, operand 0, single buffered']
    %7 = vsyncpa [#allocation3], 0
    %8 = vsyncpa [#allocation6], 0
    %9 = vsyncpa [#allocation4], 0
    // Predicated region
    $region2: #{tpu_custom_call.1} parent=1 // pred_check
      _
    $region3: #{tpu_custom_call.1} parent=1 // pred_check_branch
      %11 = sbr.rel (0) target = $region5
    $region4: #{tpu_custom_call.1} parent=1 // pred_region
      %s13 = ssub.s32 256, 256
      %14 = vsyncadd [#allocation3], %s13
      %s15 = sshll.u32 [#allocation2], 4
      %s16 = int_to_ptr.vmem [resolvable:$true] %s15
      %21 = dma.hbm_to_vmem [thread:$0]  %s0, 256, %s16, [#allocation3], 128, 128, 8
    $region5: #{tpu_custom_call.1} parent=1 // pred_fallthru
      _
    // Predicated region
    $region6: #{tpu_custom_call.1} parent=1 // pred_check
      _
    $region7: #{tpu_custom_call.1} parent=1 // pred_check_branch
      %23 = sbr.rel (0) target = $region9
    $region8: #{tpu_custom_call.1} parent=1 // pred_region
      %s25 = ssub.s32 256, 256
      %26 = vsyncadd [#allocation6], %s25
      %s27 = sshll.u32 [#allocation5], 4
      %s28 = int_to_ptr.vmem [resolvable:$true] %s27
      %33 = dma.hbm_to_vmem [thread:$0]  %s1, 256, %s28, [#allocation6], 128, 128, 8
    $region9: #{tpu_custom_call.1} parent=1 // pred_fallthru
      _
    // Predicated region
    $region10: #{tpu_custom_call.1} parent=1 // pred_check
      _
    $region11: #{tpu_custom_call.1} parent=1 // pred_check_branch
      %35 = sbr.rel (0) target = $region13
    $region12: #{tpu_custom_call.1} parent=1 // pred_region
      %36 = dma.done [#allocation3], 256
    $region13: #{tpu_custom_call.1} parent=1 // pred_fallthru
      _
    // Predicated region
    $region14: #{tpu_custom_call.1} parent=1 // pred_check
      _
    $region15: #{tpu_custom_call.1} parent=1 // pred_check_branch
      %38 = sbr.rel (0) target = $region17
    $region16: #{tpu_custom_call.1} parent=1 // pred_region
      %39 = dma.done [#allocation6], 256
    $region17: #{tpu_custom_call.1} parent=1 // pred_fallthru
      _
    %v40 = vld [vmem:[#allocation2] sm:$0xff]
    %v41 = vld [vmem:[#allocation2 + $0x8] sm:$0xff]
    %v42 = vld [vmem:[#allocation5] sm:$0xff]
    %v43 = vld [vmem:[#allocation5 + $0x8] sm:$0xff]
    %v44 = vsub.f32 %v40, %v42
    %v45 = vsub.f32 %v41, %v43
    %v46 = vmul.f32 %v44, %v44
    %v47 = vmul.f32 %v45, %v45
    %v48 = vadd.f32 %v46, 1e-06
    %v49 = vadd.f32 %v47, 1e-06
    %v50 = vrsqrt.pop %v48
    %v51 = vmul.f32 %v48, %v50
    %vm52 = vcmp.eq.f32.partialorder %v48, inf
    %v53 = vsel %vm52, %v48, %v51
    %vm54 = vcmp.eq.f32.partialorder %v48, 0.0
    %v55 = vand.u32 %v48, 2147483648
    %v56 = vsel %vm54, %v55, %v53
    %v57 = vrsqrt.pop %v49
    %v58 = vmul.f32 %v49, %v57
    %vm59 = vcmp.eq.f32.partialorder %v49, inf
    %v60 = vsel %vm59, %v49, %v58
    %vm61 = vcmp.eq.f32.partialorder %v49, 0.0
    %v62 = vand.u32 %v49, 2147483648
    %v63 = vsel %vm61, %v62, %v60
    %v64 = vadd.f32 %v56, 0.0
    %v65 = vadd.f32 %v63, 0.0
    %v66 = vadd.f32 %v64, %v65
    %67 = vst [vmem:[#allocation7] sm:$0xff] %v66
    // Predicated region
    $region18: #{tpu_custom_call.1} parent=1 // pred_check
      _
    $region19: #{tpu_custom_call.1} parent=1 // pred_check_branch
      %69 = sbr.rel (0) target = $region21
    $region20: #{tpu_custom_call.1} parent=1 // pred_region
      %s71 = ssub.s32 128, 128
      %72 = vsyncadd [#allocation4], %s71
      %s74 = sshll.u32 [#allocation7], 4
      %s75 = int_to_ptr.vmem [resolvable:$true] %s74
      %77 = dma.vmem_to_hbm [thread:$0]  %s75, 128, %s2, [#allocation4]
    $region21: #{tpu_custom_call.1} parent=1 // pred_fallthru
      _
    // Predicated region
    $region22: #{tpu_custom_call.1} parent=1 // pred_check
      _
    $region23: #{tpu_custom_call.1} parent=1 // pred_check_branch
      %79 = sbr.rel (0) target = $region25
    $region24: #{tpu_custom_call.1} parent=1 // pred_region
      %80 = dma.done [#allocation4], 128
    $region25: #{tpu_custom_call.1} parent=1 // pred_fallthru
      _
    %81 = vsyncpa [#allocation3], 1
    %82 = vsyncpa [#allocation6], 1
    %83 = vsyncpa [#allocation4], 1

</llo_original>
